<compile_context>
chip_gen: v5e
topology: v5e:2x2
jax: 0.10.0
libtpu: 0.0.40
codegen_flags: <defaults>
</compile_context>

<pallas_src>
import jax
import jax.numpy as jnp
from jax.experimental import pallas as pl
from jax.experimental.pallas import tpu as pltpu


def _prompt_encoder_kernel(ids_ref, table_ref, out_ref):
    # ids_ref:   (2*bs, 1)               int32
    #            rows ordered [b0-level, b0-type, b1-level, b1-type, ...];
    #            type indices are pre-offset by num_level in the wrapper.
    # table_ref: (num_level+num_type, D) f32  == concat(level_table, type_table)
    # out_ref:   (2*bs, D)               f32  (lane-dense 2-D slab, single store)
    n_rows = ids_ref.shape[0]
    n_tbl = table_ref.shape[0]

    ids = ids_ref[...]                                                # (2*bs, 1)
    iota = jax.lax.broadcasted_iota(jnp.int32, (n_rows, n_tbl), 1)    # (2*bs, NT)
    onehot = (ids == iota).astype(jnp.float32)                        # (2*bs, NT)

    # Single fused gather-as-matmul; exact for f32 tables (0/1 selector).
    out_ref[...] = jnp.dot(onehot, table_ref[...],
                           preferred_element_type=jnp.float32)


def prompt_encoder_multi_forward(levels, types, level_table, type_table):
    """JAX wrapper mirroring PromptEncoderMulti.forward(levels, types).

    levels:      (bs,) int  — index into level_table rows
    types:       (bs,) int  — index into type_table rows
    level_table: (num_level, embed_dim) f32  (stacked nn.Embedding(1, D) weights)
    type_table:  (num_type,  embed_dim) f32
    returns:     (bs, 2, embed_dim) f32  == torch sparse_embeddings
    """
    bs = levels.shape[0]
    num_level, embed_dim = level_table.shape
    num_type = type_table.shape[0]
    n_tbl = num_level + num_type

    # Fused gather table and a single interleaved index vector
    # (one DMA each instead of two tables + two index arrays).
    table = jnp.concatenate([level_table, type_table], axis=0)        # (NT, D)
    ids = jnp.stack(
        [levels.astype(jnp.int32), types.astype(jnp.int32) + num_level],
        axis=1,
    ).reshape(2 * bs, 1)                                              # (2*bs, 1)

    vmem = pl.BlockSpec(memory_space=pltpu.MemorySpace.VMEM)
    cost = pl.CostEstimate(
        flops=2 * (2 * bs) * n_tbl * embed_dim,
        transcendentals=0,
        bytes_accessed=4 * (ids.size + table.size + 2 * bs * embed_dim),
    )

    out2d = pl.pallas_call(
        _prompt_encoder_kernel,
        out_shape=jax.ShapeDtypeStruct((2 * bs, embed_dim), jnp.float32),
        in_specs=[vmem, vmem],
        out_specs=vmem,
        cost_estimate=cost,
    )(ids, table)

    # Row 2*i is the level embedding of batch i, row 2*i+1 is the type
    # embedding, so a free row-major reshape recovers (bs, 2, D).
    return out2d.reshape(bs, 2, embed_dim)


if __name__ == "__main__":
    # Module hyper-params (small, consistent with __init__ signature).
    num_level = 3
    num_type = 4
    embed_dim = 32
    bs = 2
    # image_embedding_size / input_image_size / pe_layer are not used by forward().
    # TODO(synk): get_dense_pe() (PositionEmbeddingRandom grid PE) is a separate
    # method, not part of forward(), so it is not implemented here.

    key = jax.random.PRNGKey(0)
    k_lvl, k_typ = jax.random.split(key)
    # nn.Embedding(1, embed_dim) weights default to N(0, 1); stack the
    # num_level / num_type single-row embeddings into gather tables.
    level_table = jax.random.normal(k_lvl, (num_level, embed_dim), dtype=jnp.float32)
    type_table = jax.random.normal(k_typ, (num_type, embed_dim), dtype=jnp.float32)

    levels = jnp.array([1, 2], dtype=jnp.int32)  # (bs,)
    types = jnp.array([0, 3], dtype=jnp.int32)   # (bs,)

    out = prompt_encoder_multi_forward(levels, types, level_table, type_table)
    out = jax.block_until_ready(out)

    # Pure-JAX reference check (same semantics as the PyTorch loop gather).
    ref = jnp.stack(
        [jnp.take(level_table, levels, axis=0),
         jnp.take(type_table, types, axis=0)],
        axis=1,
    )
    assert out.shape == (bs, 2, embed_dim), out.shape
    assert out.dtype == jnp.float32
    assert jnp.allclose(out, ref, atol=1e-6), "mismatch vs reference"

    print("KERNEL_OK")
</pallas_src>

<mosaic_0001>
module attributes {stable_mosaic.version = 11 : i64} {
  func.func @_prompt_encoder_kernel(%arg0: memref<4x1xi32, #tpu.memory_space<vmem>>, %arg1: memref<7x32xf32, #tpu.memory_space<vmem>>, %arg2: memref<4x32xf32, #tpu.memory_space<vmem>>) attributes {dimension_semantics = [], scalar_prefetch = 0 : i64, scratch_operands = 0 : i64, tpu.core_type = #tpu.core_type<tc>} {
    %c0 = arith.constant 0 : index
    %c0_0 = arith.constant 0 : index
    %0 = vector.load %arg0[%c0, %c0_0] : memref<4x1xi32, #tpu.memory_space<vmem>>, vector<4x1xi32>
    %1 = tpu.iota {dimensions = array<i32: 1>} : vector<4x7xi32>
    %2 = vector.broadcast %0 : vector<4x1xi32> to vector<4x7xi32>
    %3 = arith.cmpi eq, %2, %1 : vector<4x7xi32>
    %4 = arith.extui %3 : vector<4x7xi1> to vector<4x7xi32>
    %5 = arith.sitofp %4 : vector<4x7xi32> to vector<4x7xf32>
    %c0_1 = arith.constant 0 : index
    %c0_2 = arith.constant 0 : index
    %6 = vector.load %arg1[%c0_1, %c0_2] : memref<7x32xf32, #tpu.memory_space<vmem>>, vector<7x32xf32>
    %cst = arith.constant dense<0.000000e+00> : vector<4x32xf32>
    %7 = tpu.matmul %5, %6, %cst {dimension_numbers = #tpu.dot_dimension_numbers<[1], [0], [0], [1], [0, 0, 1, 1], [], []>} : vector<4x7xf32>, vector<7x32xf32>, vector<4x32xf32> -> vector<4x32xf32>
    %c0_3 = arith.constant 0 : index
    %c0_4 = arith.constant 0 : index
    %8 = vector.load %arg2[%c0_3, %c0_4] : memref<4x32xf32, #tpu.memory_space<vmem>>, vector<4x32xf32>
    tpu.vector_store %arg2[%c0_3, %c0_4], %7 {strides = array<i32>} : memref<4x32xf32, #tpu.memory_space<vmem>>, vector<4x32xf32>,
    return
  }
}

</mosaic_0001>

<llo_original>
// kernel: tpu_custom_call.1
$region0: #{tpu_custom_call.1}
  #allocation0 [shape = 'u32[]', space=smem, size = 0x4, offset = 0x4, fixed_abs, tag = 'smem constant byte address 0x4 - core index']
  #allocation1 [shape = 'u32[72,128]{1,0:T(1,128)}', space=vmem, size = 0x9000, scoped, tag = 'internal scratch']
  %s0 = inlined_call_operand.vmem [shape: s32[4,1], index: 0, kind: input, shape index: {}]
  %s1 = inlined_call_operand.hbm [shape: f32[7,32], index: 1, kind: input, shape index: {}]
  %s2 = inlined_call_operand.hbm [shape: f32[4,32], index: 2, kind: output, shape index: {}]
  %s3 = sld [smem:[#allocation0]]
  $region22: #{tpu_custom_call.1} parent=0
    _
  %s5 = ssub.s32 1, %s3
  %s6 = scalar_select 0, %s5, %s3
  $region1: #{tpu_custom_call.1} parent=0
    #allocation2 [shape = 'u8[4096]{0}', space=vmem, size = 0x1000, scoped, tag = 'input window, operand 1, single buffered']
    #allocation3 [shape = 's32[1]{0}', space=sflag, size = 0x4, scoped, tag = 'scoped memory for tpu_custom_call.1']
    #allocation4 [shape = 's32[1]{0}', space=sflag, size = 0x4, scoped, tag = 'scoped memory for tpu_custom_call.1']
    #allocation5 [shape = 'u8[2048]{0}', space=vmem, size = 0x800, scoped, tag = 'output window, operand 0, single buffered']
    %7 = vsyncpa [#allocation3], 0
    %8 = vsyncpa [#allocation4], 0
    // Predicated region
    $region2: #{tpu_custom_call.1} parent=1 // pred_check
      _
    $region3: #{tpu_custom_call.1} parent=1 // pred_check_branch
      %10 = sbr.rel (0) target = $region5
    $region4: #{tpu_custom_call.1} parent=1 // pred_region
      _
    $region5: #{tpu_custom_call.1} parent=1 // pred_fallthru
      _
    // Predicated region
    $region6: #{tpu_custom_call.1} parent=1 // pred_check
      _
    $region7: #{tpu_custom_call.1} parent=1 // pred_check_branch
      %12 = sbr.rel (0) target = $region9
    $region8: #{tpu_custom_call.1} parent=1 // pred_region
      %14 = vsyncadd [#allocation3], 0
      %s16 = sshll.u32 %s1, 4
      %s17 = int_to_ptr.hbm [resolvable:$true] %s16
      %s18 = sshll.u32 [#allocation2], 4
      %s19 = int_to_ptr.vmem [resolvable:$true] %s18
      %21 = dma.hbm_to_vmem [thread:$0]  %s17, 128, %s19, [#allocation3]
    $region9: #{tpu_custom_call.1} parent=1 // pred_fallthru
      _
    // Predicated region
    $region10: #{tpu_custom_call.1} parent=1 // pred_check
      _
    $region11: #{tpu_custom_call.1} parent=1 // pred_check_branch
      %23 = sbr.rel (0) target = $region13
    $region12: #{tpu_custom_call.1} parent=1 // pred_region
      %25 = dma.done [#allocation3], 128
    $region13: #{tpu_custom_call.1} parent=1 // pred_fallthru
      _
    %v26 = vld [vmem:[%s0] sm:$0xf]
    %v27 = vlaneseq
    %v28 = vand.u32 %v27, 127
    %29 = vset.pattern.permute.xlu0 0
    %30 = vperm.xlu0 %29, %v26
    %v31 = vpop.permute.xlu0 %30
    %vm32 = vcmp.eq.s32.totalorder %v31, %v28
    %v33 = vsel %vm32, 1, 0
    %v34 = vcvt.s32.f32 %v33
    %v35 = vld [vmem:[#allocation2] sm:$0x7f]
    %vm36 = vcmask 56320
    %v38 = vsel %vm36, %v34, 0
    %vm40 = vcmask 1046528
    %v42 = vsel %vm40, %v35, 0
    %44 = vmatpush.msra.mxu0 0.0
    %45 = vmatpush.msra.mxu0 0.0
    %46 = vmatpush.msra.mxu0 0.0
    %47 = vmatpush.msra.mxu0 0.0
    %48 = vmatpush.msra.mxu0 0.0
    %49 = vmatpush.msra.mxu0 0.0
    %50 = vmatpush.msra.mxu0 0.0
    %51 = vmatpush.msra.mxu0 0.0
    %52 = vmatpush.msra.mxu0 0.0
    %53 = vmatpush.msra.mxu0 0.0
    %54 = vmatpush.msra.mxu0 0.0
    %55 = vmatpush.msra.mxu0 0.0
    %56 = vmatpush.msra.mxu0 0.0
    %57 = vmatpush.msra.mxu0 0.0
    %58 = vmatpush.msra.mxu0 0.0
    %59 = vmatpush.msra.mxu0 %v42
    %60 = vmatmul.f32.gmra.mxu0 %v38
    %v61 = vpop.f32.mrf.mxu0
    %v62 = vadd.f32 0.0, %v61
    %63 = vdwg.mxu0
    %vm64 = vcmask 257024
    %65 = vst.msk [vmem:[#allocation5] sm:$0xf] %vm64, %v62
    // Predicated region
    $region14: #{tpu_custom_call.1} parent=1 // pred_check
      _
    $region15: #{tpu_custom_call.1} parent=1 // pred_check_branch
      %67 = sbr.rel (0) target = $region17
    $region16: #{tpu_custom_call.1} parent=1 // pred_region
      %69 = vsyncadd [#allocation4], 0
      %s71 = sshll.u32 [#allocation5], 4
      %s72 = int_to_ptr.vmem [resolvable:$true] %s71
      %s73 = sshll.u32 %s2, 4
      %s74 = int_to_ptr.hbm [resolvable:$true] %s73
      %76 = dma.vmem_to_hbm [thread:$0]  %s72, 64, %s74, [#allocation4]
    $region17: #{tpu_custom_call.1} parent=1 // pred_fallthru
      _
    // Predicated region
    $region18: #{tpu_custom_call.1} parent=1 // pred_check
      _
    $region19: #{tpu_custom_call.1} parent=1 // pred_check_branch
      %78 = sbr.rel (0) target = $region21
    $region20: #{tpu_custom_call.1} parent=1 // pred_region
      %80 = dma.done [#allocation4], 64
    $region21: #{tpu_custom_call.1} parent=1 // pred_fallthru
      _
    %81 = vsyncpa [#allocation3], 1
    %82 = vsyncpa [#allocation4], 1

</llo_original>
